<compile_context>
chip_gen: v5e
topology: v5e:2x2
jax: 0.10.0
libtpu: 0.0.40
codegen_flags: <defaults>
</compile_context>

<pallas_src>
import functools

import jax
import jax.numpy as jnp
from jax.experimental import pallas as pl
from jax.experimental.pallas import tpu as pltpu


def _cdiv(a, b):
    return (a + b - 1) // b


def _round_up(v, m):
    return _cdiv(v, m) * m


def _vmem_limit_bytes():
    """~half of physical VMEM: ~32 MiB on v7x (64 MiB phys), ~64 MiB on v5e/v6e."""
    try:
        cap = int(pltpu.get_tpu_info().vmem_capacity_bytes)
    except Exception:
        cap = 64 * 1024 * 1024  # conservative (v7x-sized) default
    return int(min(max(cap // 2, 16 * 1024 * 1024), 96 * 1024 * 1024))


def _relu_conv(x1_ref, x2_ref, w1_ref, w2_ref):
    # Two dense (C_half, C_in) x (C_in, TM) MXU dots; no zero block-diagonal padding.
    h1 = jnp.maximum(x1_ref[...].astype(jnp.float32), 0.0)
    h2 = jnp.maximum(x2_ref[...].astype(jnp.float32), 0.0)
    y1 = jnp.dot(w1_ref[...], h1, preferred_element_type=jnp.float32)
    y2 = jnp.dot(w2_ref[...], h2, preferred_element_type=jnp.float32)
    return jnp.concatenate([y1, y2], axis=0)            # (C_out, TM)


# ---------------- fused path: one pallas_call, conv result resident in VMEM -------------
def _fused_kernel(x1_ref, x2_ref, w1_ref, w2_ref, gamma_ref, beta_ref, o_ref,
                  y_scr, sum_scr, ssq_scr, scale_scr, shift_scr,
                  *, L, TM, n_t, inv_count, eps):
    p = pl.program_id(0)      # 0: conv + stats, 1: BN apply
    g = pl.program_id(1)      # batch group
    t = pl.program_id(2)      # lane tile
    idx = g * n_t + t

    @pl.when(p == 0)
    def _conv_and_stats():
        @pl.when((g == 0) & (t == 0))
        def _init():
            sum_scr[...] = jnp.zeros_like(sum_scr)
            ssq_scr[...] = jnp.zeros_like(ssq_scr)

        y = _relu_conv(x1_ref, x2_ref, w1_ref, w2_ref)
        y_scr[idx] = y
        if L % TM != 0:  # mask ragged last-tile columns out of the statistics only
            col = t * TM + jax.lax.broadcasted_iota(jnp.int32, (1, TM), 1)
            y = jnp.where(col < L, y, 0.0)
        sum_scr[...] += jnp.sum(y, axis=1, keepdims=True)
        ssq_scr[...] += jnp.sum(y * y, axis=1, keepdims=True)

    @pl.when(p == 1)
    def _bn_apply():
        @pl.when((g == 0) & (t == 0))
        def _fold():
            # Note: E[y^2]-E[y]^2 can cancel when |mean| >> std; acceptable here, a
            # centered/Welford combine would be more robust for extreme activations.
            mean = sum_scr[...] * inv_count
            var = ssq_scr[...] * inv_count - mean * mean
            inv = jax.lax.rsqrt(var + eps)
            scale_scr[...] = gamma_ref[...] * inv
            shift_scr[...] = beta_ref[...] - mean * gamma_ref[...] * inv
        o_ref[...] = y_scr[idx] * scale_scr[...] + shift_scr[...]


# -------------- fallback path: two megacore-parallel passes, conv recomputed ------------
def _stats_kernel(x1_ref, x2_ref, w1_ref, w2_ref, sum_ref, ssq_ref, *, L, TM):
    y = _relu_conv(x1_ref, x2_ref, w1_ref, w2_ref)
    if L % TM != 0:
        t = pl.program_id(1)
        col = t * TM + jax.lax.broadcasted_iota(jnp.int32, (1, TM), 1)
        y = jnp.where(col < L, y, 0.0)
    sum_ref[...] = jnp.sum(y, axis=1, keepdims=True)
    ssq_ref[...] = jnp.sum(y * y, axis=1, keepdims=True)


def _apply_kernel(x1_ref, x2_ref, w1_ref, w2_ref, scale_ref, shift_ref, o_ref):
    y = _relu_conv(x1_ref, x2_ref, w1_ref, w2_ref)
    o_ref[...] = y * scale_ref[...] + shift_ref[...]


def factorized_reduce(x_nchw, w1, w2, gamma, beta, *, eps=1e-5):
    """x_nchw: (N, C_in, H, W); w1/w2: (C_out//2, C_in, 1, 1); gamma/beta: (C_out,)."""
    N, C_in, H, W = x_nchw.shape
    C_half = w1.shape[0]
    C_out = 2 * C_half
    assert H % 2 == 0 and W % 2 == 0, "FactorizedReduce needs even spatial dims"
    Ho, Wo = H // 2, W // 2
    HW = Ho * Wo
    M = N * HW

    # Stride-2 phase extraction (conv_1 sees x[2i,2j]; conv_2 sees x[2i+1,2j+1]); the
    # kernel never does strided access on materialized values.
    x_ee = x_nchw[:, :, 0::2, 0::2].astype(jnp.float32)
    x_oo = x_nchw[:, :, 1::2, 1::2].astype(jnp.float32)

    if HW >= 128:
        # Lane axis = Ho*Wo, batch stays a leading grid axis: no transposes at all.
        G, L = N, HW
        x1 = x_ee.reshape(N, C_in, HW)
        x2 = x_oo.reshape(N, C_in, HW)

        def unpack(o):                                   # (N, C_out, HW) -> NCHW (free)
            return o.reshape(N, C_out, Ho, Wo)
    else:
        # Tiny images: flatten batch*spatial onto the lane axis (needs a channel-major
        # transpose, but the tensor is tiny here by construction).
        G, L = 1, M
        x1 = jnp.transpose(x_ee, (1, 0, 2, 3)).reshape(1, C_in, M)
        x2 = jnp.transpose(x_oo, (1, 0, 2, 3)).reshape(1, C_in, M)

        def unpack(o):
            return jnp.transpose(o.reshape(C_out, N, Ho, Wo), (1, 0, 2, 3))

    w1m = w1[:, :, 0, 0].astype(jnp.float32)             # (C_half, C_in)
    w2m = w2[:, :, 0, 0].astype(jnp.float32)
    g2 = gamma.astype(jnp.float32).reshape(C_out, 1)
    b2 = beta.astype(jnp.float32).reshape(C_out, 1)

    # ---- tile sizing from the chip's VMEM budget ----
    vmem_limit = _vmem_limit_bytes()
    budget = (vmem_limit * 3) // 4
    bytes_per_col = 2 * (2 * C_in + C_out) * 4            # double-buffered x1+x2+out, f32
    tm_cap = max(128, (budget // 2) // bytes_per_col // 128 * 128)
    if L <= tm_cap:
        TM, n_t = L, 1                                    # single full-extent tile / group
    else:
        n_t = _cdiv(L, tm_cap)
        TM = _round_up(_cdiv(L, n_t), 128)                # balanced tiles, tail < 128 cols
        n_t = _cdiv(L, TM)

    # Fully fused path only if the whole conv result fits VMEM next to pipeline buffers.
    y_scr_bytes = G * n_t * _round_up(C_out, 8) * _round_up(TM, 128) * 4
    fused = y_scr_bytes <= budget // 2

    conv_flops = 2 * C_out * C_in * G * L

    if fused:
        # grid = (bn_phase, batch group, lane tile); the stats/scratch carry makes every
        # axis sequential ("arbitrary").
        x_map = lambda p, g, t: (g * (1 - p) + (G - 1) * p, 0, t * (1 - p) + (n_t - 1) * p)
        w_map = lambda p, g, t: (0, 0)
        out_cm = pl.pallas_call(
            functools.partial(_fused_kernel, L=L, TM=TM, n_t=n_t,
                              inv_count=1.0 / float(G * L), eps=float(eps)),
            grid=(2, G, n_t),
            in_specs=[
                pl.BlockSpec((None, C_in, TM), x_map),
                pl.BlockSpec((None, C_in, TM), x_map),
                pl.BlockSpec((C_half, C_in), w_map),
                pl.BlockSpec((C_half, C_in), w_map),
                pl.BlockSpec((C_out, 1), w_map),
                pl.BlockSpec((C_out, 1), w_map),
            ],
            out_specs=pl.BlockSpec((None, C_out, TM), lambda p, g, t: (g * p, 0, t * p)),
            out_shape=jax.ShapeDtypeStruct((G, C_out, L), jnp.float32),
            scratch_shapes=[
                pltpu.VMEM((G * n_t, C_out, TM), jnp.float32),   # resident conv result
                pltpu.VMEM((C_out, 1), jnp.float32),             # sum
                pltpu.VMEM((C_out, 1), jnp.float32),             # sum of squares
                pltpu.VMEM((C_out, 1), jnp.float32),             # folded scale
                pltpu.VMEM((C_out, 1), jnp.float32),             # folded shift
            ],
            compiler_params=pltpu.CompilerParams(
                dimension_semantics=("arbitrary", "arbitrary", "arbitrary"),
                vmem_limit_bytes=vmem_limit),
            cost_estimate=pl.CostEstimate(
                flops=conv_flops + 2 * C_out * G * L,
                transcendentals=0,
                bytes_accessed=4 * G * L * (2 * C_in + C_out)),
        )(x1, x2, w1m, w2m, g2, b2)
        return unpack(out_cm)

    # -------- fallback: two megacore-parallel passes, conv recomputed in pass 2 --------
    if G * n_t < 2 and L > 128:                           # give both v7x TCs work
        TM = _round_up(_cdiv(L, 2), 128)
        n_t = _cdiv(L, TM)

    x_spec = pl.BlockSpec((None, C_in, TM), lambda g, t: (g, 0, t))
    w_spec = pl.BlockSpec((C_half, C_in), lambda g, t: (0, 0))
    v_spec = pl.BlockSpec((C_out, 1), lambda g, t: (0, 0))
    cparams_par = pltpu.CompilerParams(
        dimension_semantics=("parallel", "parallel"), vmem_limit_bytes=vmem_limit)

    sums, ssqs = pl.pallas_call(
        functools.partial(_stats_kernel, L=L, TM=TM),
        grid=(G, n_t),
        in_specs=[x_spec, x_spec, w_spec, w_spec],
        out_specs=[
            pl.BlockSpec((None, None, C_out, 1), lambda g, t: (g, t, 0, 0)),
            pl.BlockSpec((None, None, C_out, 1), lambda g, t: (g, t, 0, 0)),
        ],
        out_shape=[
            jax.ShapeDtypeStruct((G, n_t, C_out, 1), jnp.float32),
            jax.ShapeDtypeStruct((G, n_t, C_out, 1), jnp.float32),
        ],
        compiler_params=cparams_par,
        cost_estimate=pl.CostEstimate(
            flops=conv_flops + 3 * C_out * G * L,
            transcendentals=0,
            bytes_accessed=4 * G * L * 2 * C_in),
    )(x1, x2, w1m, w2m)

    count = float(G * L)
    mean = jnp.sum(sums[..., 0], axis=(0, 1)) / count     # (C_out,)
    var = jnp.sum(ssqs[..., 0], axis=(0, 1)) / count - mean * mean
    inv = jax.lax.rsqrt(var + eps)
    scale = (g2[:, 0] * inv).reshape(C_out, 1)
    shift = (b2[:, 0] - mean * g2[:, 0] * inv).reshape(C_out, 1)

    out_cm = pl.pallas_call(
        _apply_kernel,
        grid=(G, n_t),
        in_specs=[x_spec, x_spec, w_spec, w_spec, v_spec, v_spec],
        out_specs=pl.BlockSpec((None, C_out, TM), lambda g, t: (g, 0, t)),
        out_shape=jax.ShapeDtypeStruct((G, C_out, L), jnp.float32),
        compiler_params=cparams_par,
        cost_estimate=pl.CostEstimate(
            flops=conv_flops + 2 * C_out * G * L,
            transcendentals=0,
            bytes_accessed=4 * G * L * (2 * C_in + C_out)),
    )(x1, x2, w1m, w2m, scale, shift)
    return unpack(out_cm)


def factorized_reduce_ref(x, w1, w2, gamma, beta, eps=1e-5):
    # pure-JAX reference of the PyTorch forward (NCHW), for verification
    h = jnp.maximum(x, 0.0)
    dn = ("NCHW", "OIHW", "NCHW")
    o1 = jax.lax.conv_general_dilated(h, w1, (2, 2), "VALID", dimension_numbers=dn)
    o2 = jax.lax.conv_general_dilated(h[:, :, 1:, 1:], w2, (2, 2), "VALID",
                                      dimension_numbers=dn)
    out = jnp.concatenate([o1, o2], axis=1)
    mean = jnp.mean(out, axis=(0, 2, 3), keepdims=True)
    var = jnp.mean((out - mean) ** 2, axis=(0, 2, 3), keepdims=True)
    outn = (out - mean) * jax.lax.rsqrt(var + eps)
    return outn * gamma.reshape(1, -1, 1, 1) + beta.reshape(1, -1, 1, 1)


if __name__ == "__main__":
    N, C_in, C_out, H, W = 2, 4, 4, 16, 16

    key = jax.random.PRNGKey(0)
    kx, k1, k2, kg, kb = jax.random.split(key, 5)
    x = jax.random.normal(kx, (N, C_in, H, W), dtype=jnp.float32)
    w1 = 0.2 * jax.random.normal(k1, (C_out // 2, C_in, 1, 1), dtype=jnp.float32)
    w2 = 0.2 * jax.random.normal(k2, (C_out // 2, C_in, 1, 1), dtype=jnp.float32)
    gamma = 1.0 + 0.1 * jax.random.normal(kg, (C_out,), dtype=jnp.float32)
    beta = 0.1 * jax.random.normal(kb, (C_out,), dtype=jnp.float32)

    fwd = jax.jit(factorized_reduce)
    out = jax.block_until_ready(fwd(x, w1, w2, gamma, beta))
    ref = jax.block_until_ready(factorized_reduce_ref(x, w1, w2, gamma, beta))

    assert out.shape == (N, C_out, H // 2, W // 2), out.shape
    max_err = float(jnp.max(jnp.abs(out - ref)))
    assert jnp.allclose(out, ref, atol=1e-3, rtol=1e-3), max_err
    print("KERNEL_OK")
</pallas_src>

<mosaic_0001>
module attributes {stable_mosaic.version = 11 : i64} {
  func.func @_fused_kernel(%arg0: i32, %arg1: i32, %arg2: i32, %arg3: memref<1x4x128xf32, #tpu.memory_space<vmem>>, %arg4: memref<1x4x128xf32, #tpu.memory_space<vmem>>, %arg5: memref<2x4xf32, #tpu.memory_space<vmem>>, %arg6: memref<2x4xf32, #tpu.memory_space<vmem>>, %arg7: memref<4x1xf32, #tpu.memory_space<vmem>>, %arg8: memref<4x1xf32, #tpu.memory_space<vmem>>, %arg9: memref<1x4x128xf32, #tpu.memory_space<vmem>>, %arg10: memref<1x4x128xf32, #tpu.memory_space<vmem>>, %arg11: memref<4x1xf32, #tpu.memory_space<vmem>>, %arg12: memref<4x1xf32, #tpu.memory_space<vmem>>, %arg13: memref<4x1xf32, #tpu.memory_space<vmem>>, %arg14: memref<4x1xf32, #tpu.memory_space<vmem>>) attributes {dimension_semantics = [#tpu.dimension_semantics<arbitrary>, #tpu.dimension_semantics<arbitrary>, #tpu.dimension_semantics<arbitrary>], iteration_bounds = array<i64: 2, 1, 1>, scalar_prefetch = 0 : i64, scratch_operands = 5 : i64, tpu.core_type = #tpu.core_type<tc>, window_params = [{transform_indices = @transform_0, window_bounds = array<i64: 1, 4, 128>}, {transform_indices = @transform_1, window_bounds = array<i64: 1, 4, 128>}, {pipeline_mode = #tpu.pipeline_mode<synchronous>, transform_indices = @transform_2, window_bounds = array<i64: 2, 4>}, {pipeline_mode = #tpu.pipeline_mode<synchronous>, transform_indices = @transform_3, window_bounds = array<i64: 2, 4>}, {pipeline_mode = #tpu.pipeline_mode<synchronous>, transform_indices = @transform_4, window_bounds = array<i64: 4, 1>}, {pipeline_mode = #tpu.pipeline_mode<synchronous>, transform_indices = @transform_5, window_bounds = array<i64: 4, 1>}, {transform_indices = @transform_6, window_bounds = array<i64: 1, 4, 128>}]} {
    %c1_i32 = arith.constant 1 : i32
    %0 = arith.muli %arg1, %c1_i32 : i32
    %1 = arith.addi %0, %arg2 : i32
    %c0_i32 = arith.constant 0 : i32
    %2 = arith.cmpi eq, %arg0, %c0_i32 : i32
    %3 = arith.extui %2 : i1 to i32
    %c0_i32_0 = arith.constant 0 : i32
    %4 = arith.cmpi ne, %3, %c0_i32_0 : i32
    scf.if %4 {
      %c0_i32_3 = arith.constant 0 : i32
      %8 = arith.cmpi eq, %arg1, %c0_i32_3 : i32
      %c0_i32_4 = arith.constant 0 : i32
      %9 = arith.cmpi eq, %arg2, %c0_i32_4 : i32
      %10 = arith.andi %8, %9 : i1
      %11 = arith.extui %10 : i1 to i32
      %c0_i32_5 = arith.constant 0 : i32
      %12 = arith.cmpi ne, %11, %c0_i32_5 : i32
      scf.if %12 {
        %cst_30 = arith.constant 0.000000e+00 : f32
        %41 = vector.broadcast %cst_30 : f32 to vector<4x1xf32>
        %c0_31 = arith.constant 0 : index
        %c0_32 = arith.constant 0 : index
        %42 = vector.load %arg11[%c0_31, %c0_32] : memref<4x1xf32, #tpu.memory_space<vmem>>, vector<4x1xf32>
        tpu.vector_store %arg11[%c0_31, %c0_32], %41 {strides = array<i32>} : memref<4x1xf32, #tpu.memory_space<vmem>>, vector<4x1xf32>,
        %cst_33 = arith.constant 0.000000e+00 : f32
        %43 = vector.broadcast %cst_33 : f32 to vector<4x1xf32>
        %c0_34 = arith.constant 0 : index
        %c0_35 = arith.constant 0 : index
        %44 = vector.load %arg12[%c0_34, %c0_35] : memref<4x1xf32, #tpu.memory_space<vmem>>, vector<4x1xf32>
        tpu.vector_store %arg12[%c0_34, %c0_35], %43 {strides = array<i32>} : memref<4x1xf32, #tpu.memory_space<vmem>>, vector<4x1xf32>,
      } else {
      }
      %c0 = arith.constant 0 : index
      %c0_6 = arith.constant 0 : index
      %c0_7 = arith.constant 0 : index
      %13 = vector.load %arg3[%c0, %c0_6, %c0_7] : memref<1x4x128xf32, #tpu.memory_space<vmem>>, vector<1x4x128xf32>
      %14 = vector.shape_cast %13 : vector<1x4x128xf32> to vector<4x128xf32>
      %cst = arith.constant 0.000000e+00 : f32
      %15 = vector.broadcast %cst : f32 to vector<4x128xf32>
      %16 = arith.maximumf %14, %15 : vector<4x128xf32>
      %c0_8 = arith.constant 0 : index
      %c0_9 = arith.constant 0 : index
      %c0_10 = arith.constant 0 : index
      %17 = vector.load %arg4[%c0_8, %c0_9, %c0_10] : memref<1x4x128xf32, #tpu.memory_space<vmem>>, vector<1x4x128xf32>
      %18 = vector.shape_cast %17 : vector<1x4x128xf32> to vector<4x128xf32>
      %cst_11 = arith.constant 0.000000e+00 : f32
      %19 = vector.broadcast %cst_11 : f32 to vector<4x128xf32>
      %20 = arith.maximumf %18, %19 : vector<4x128xf32>
      %c0_12 = arith.constant 0 : index
      %c0_13 = arith.constant 0 : index
      %21 = vector.load %arg5[%c0_12, %c0_13] : memref<2x4xf32, #tpu.memory_space<vmem>>, vector<2x4xf32>
      %cst_14 = arith.constant dense<0.000000e+00> : vector<2x128xf32>
      %22 = tpu.matmul %21, %16, %cst_14 {dimension_numbers = #tpu.dot_dimension_numbers<[1], [0], [0], [1], [0, 0, 1, 1], [], []>} : vector<2x4xf32>, vector<4x128xf32>, vector<2x128xf32> -> vector<2x128xf32>
      %c0_15 = arith.constant 0 : index
      %c0_16 = arith.constant 0 : index
      %23 = vector.load %arg6[%c0_15, %c0_16] : memref<2x4xf32, #tpu.memory_space<vmem>>, vector<2x4xf32>
      %cst_17 = arith.constant dense<0.000000e+00> : vector<2x128xf32>
      %24 = tpu.matmul %23, %20, %cst_17 {dimension_numbers = #tpu.dot_dimension_numbers<[1], [0], [0], [1], [0, 0, 1, 1], [], []>} : vector<2x4xf32>, vector<4x128xf32>, vector<2x128xf32> -> vector<2x128xf32>
      %25 = tpu.concatenate %22, %24 in 0 : vector<2x128xf32>, vector<2x128xf32> -> vector<4x128xf32>
      %26 = arith.index_cast %1 : i32 to index
      %c0_18 = arith.constant 0 : index
      %c0_19 = arith.constant 0 : index
      %27 = vector.load %arg10[%26, %c0_18, %c0_19] : memref<1x4x128xf32, #tpu.memory_space<vmem>>, vector<1x4x128xf32>
      %28 = vector.shape_cast %27 : vector<1x4x128xf32> to vector<4x128xf32>
      %29 = vector.shape_cast %25 : vector<4x128xf32> to vector<1x4x128xf32>
      tpu.vector_store %arg10[%26, %c0_18, %c0_19], %29 {strides = array<i32>} : memref<1x4x128xf32, #tpu.memory_space<vmem>>, vector<1x4x128xf32>,
      %c0_20 = arith.constant 0 : index
      %c0_21 = arith.constant 0 : index
      %30 = vector.load %arg11[%c0_20, %c0_21] : memref<4x1xf32, #tpu.memory_space<vmem>>, vector<4x1xf32>
      %cst_22 = arith.constant dense<0.000000e+00> : vector<4xf32>
      %31 = vector.multi_reduction <add>, %25, %cst_22 [1] : vector<4x128xf32> to vector<4xf32>
      %32 = vector.shape_cast %31 : vector<4xf32> to vector<4x1xf32>
      %33 = arith.addf %30, %32 : vector<4x1xf32>
      %c0_23 = arith.constant 0 : index
      %c0_24 = arith.constant 0 : index
      %34 = vector.load %arg11[%c0_23, %c0_24] : memref<4x1xf32, #tpu.memory_space<vmem>>, vector<4x1xf32>
      tpu.vector_store %arg11[%c0_23, %c0_24], %33 {strides = array<i32>} : memref<4x1xf32, #tpu.memory_space<vmem>>, vector<4x1xf32>,
      %c0_25 = arith.constant 0 : index
      %c0_26 = arith.constant 0 : index
      %35 = vector.load %arg12[%c0_25, %c0_26] : memref<4x1xf32, #tpu.memory_space<vmem>>, vector<4x1xf32>
      %36 = arith.mulf %25, %25 : vector<4x128xf32>
      %cst_27 = arith.constant dense<0.000000e+00> : vector<4xf32>
      %37 = vector.multi_reduction <add>, %36, %cst_27 [1] : vector<4x128xf32> to vector<4xf32>
      %38 = vector.shape_cast %37 : vector<4xf32> to vector<4x1xf32>
      %39 = arith.addf %35, %38 : vector<4x1xf32>
      %c0_28 = arith.constant 0 : index
      %c0_29 = arith.constant 0 : index
      %40 = vector.load %arg12[%c0_28, %c0_29] : memref<4x1xf32, #tpu.memory_space<vmem>>, vector<4x1xf32>
      tpu.vector_store %arg12[%c0_28, %c0_29], %39 {strides = array<i32>} : memref<4x1xf32, #tpu.memory_space<vmem>>, vector<4x1xf32>,
    } else {
    }
    %c1_i32_1 = arith.constant 1 : i32
    %5 = arith.cmpi eq, %arg0, %c1_i32_1 : i32
    %6 = arith.extui %5 : i1 to i32
    %c0_i32_2 = arith.constant 0 : i32
    %7 = arith.cmpi ne, %6, %c0_i32_2 : i32
    scf.if %7 {
      %c0_i32_3 = arith.constant 0 : i32
      %8 = arith.cmpi eq, %arg1, %c0_i32_3 : i32
      %c0_i32_4 = arith.constant 0 : i32
      %9 = arith.cmpi eq, %arg2, %c0_i32_4 : i32
      %10 = arith.andi %8, %9 : i1
      %11 = arith.extui %10 : i1 to i32
      %c0_i32_5 = arith.constant 0 : i32
      %12 = arith.cmpi ne, %11, %c0_i32_5 : i32
      scf.if %12 {
        %c0_14 = arith.constant 0 : index
        %c0_15 = arith.constant 0 : index
        %25 = vector.load %arg11[%c0_14, %c0_15] : memref<4x1xf32, #tpu.memory_space<vmem>>, vector<4x1xf32>
        %cst = arith.constant 7.812500e-03 : f32
        %26 = vector.broadcast %cst : f32 to vector<4x1xf32>
        %27 = arith.mulf %25, %26 : vector<4x1xf32>
        %c0_16 = arith.constant 0 : index
        %c0_17 = arith.constant 0 : index
        %28 = vector.load %arg12[%c0_16, %c0_17] : memref<4x1xf32, #tpu.memory_space<vmem>>, vector<4x1xf32>
        %cst_18 = arith.constant 7.812500e-03 : f32
        %29 = vector.broadcast %cst_18 : f32 to vector<4x1xf32>
        %30 = arith.mulf %28, %29 : vector<4x1xf32>
        %31 = arith.mulf %27, %27 : vector<4x1xf32>
        %32 = arith.subf %30, %31 : vector<4x1xf32>
        %cst_19 = arith.constant 9.99999974E-6 : f32
        %33 = vector.broadcast %cst_19 : f32 to vector<4x1xf32>
        %34 = arith.addf %32, %33 : vector<4x1xf32>
        %35 = math.rsqrt %34 : vector<4x1xf32>
        %c0_20 = arith.constant 0 : index
        %c0_21 = arith.constant 0 : index
        %36 = vector.load %arg7[%c0_20, %c0_21] : memref<4x1xf32, #tpu.memory_space<vmem>>, vector<4x1xf32>
        %37 = arith.mulf %36, %35 : vector<4x1xf32>
        %c0_22 = arith.constant 0 : index
        %c0_23 = arith.constant 0 : index
        %38 = vector.load %arg13[%c0_22, %c0_23] : memref<4x1xf32, #tpu.memory_space<vmem>>, vector<4x1xf32>
        tpu.vector_store %arg13[%c0_22, %c0_23], %37 {strides = array<i32>} : memref<4x1xf32, #tpu.memory_space<vmem>>, vector<4x1xf32>,
        %c0_24 = arith.constant 0 : index
        %c0_25 = arith.constant 0 : index
        %39 = vector.load %arg8[%c0_24, %c0_25] : memref<4x1xf32, #tpu.memory_space<vmem>>, vector<4x1xf32>
        %c0_26 = arith.constant 0 : index
        %c0_27 = arith.constant 0 : index
        %40 = vector.load %arg7[%c0_26, %c0_27] : memref<4x1xf32, #tpu.memory_space<vmem>>, vector<4x1xf32>
        %41 = arith.mulf %27, %40 : vector<4x1xf32>
        %42 = arith.mulf %41, %35 : vector<4x1xf32>
        %43 = arith.subf %39, %42 : vector<4x1xf32>
        %c0_28 = arith.constant 0 : index
        %c0_29 = arith.constant 0 : index
        %44 = vector.load %arg14[%c0_28, %c0_29] : memref<4x1xf32, #tpu.memory_space<vmem>>, vector<4x1xf32>
        tpu.vector_store %arg14[%c0_28, %c0_29], %43 {strides = array<i32>} : memref<4x1xf32, #tpu.memory_space<vmem>>, vector<4x1xf32>,
      } else {
      }
      %13 = arith.index_cast %1 : i32 to index
      %c0 = arith.constant 0 : index
      %c0_6 = arith.constant 0 : index
      %14 = vector.load %arg10[%13, %c0, %c0_6] : memref<1x4x128xf32, #tpu.memory_space<vmem>>, vector<1x4x128xf32>
      %15 = vector.shape_cast %14 : vector<1x4x128xf32> to vector<4x128xf32>
      %c0_7 = arith.constant 0 : index
      %c0_8 = arith.constant 0 : index
      %16 = vector.load %arg13[%c0_7, %c0_8] : memref<4x1xf32, #tpu.memory_space<vmem>>, vector<4x1xf32>
      %17 = vector.broadcast %16 : vector<4x1xf32> to vector<4x128xf32>
      %18 = arith.mulf %15, %17 : vector<4x128xf32>
      %c0_9 = arith.constant 0 : index
      %c0_10 = arith.constant 0 : index
      %19 = vector.load %arg14[%c0_9, %c0_10] : memref<4x1xf32, #tpu.memory_space<vmem>>, vector<4x1xf32>
      %20 = vector.broadcast %19 : vector<4x1xf32> to vector<4x128xf32>
      %21 = arith.addf %18, %20 : vector<4x128xf32>
      %c0_11 = arith.constant 0 : index
      %c0_12 = arith.constant 0 : index
      %c0_13 = arith.constant 0 : index
      %22 = vector.load %arg9[%c0_11, %c0_12, %c0_13] : memref<1x4x128xf32, #tpu.memory_space<vmem>>, vector<1x4x128xf32>
      %23 = vector.shape_cast %22 : vector<1x4x128xf32> to vector<4x128xf32>
      %24 = vector.shape_cast %21 : vector<4x128xf32> to vector<1x4x128xf32>
      tpu.vector_store %arg9[%c0_11, %c0_12, %c0_13], %24 {strides = array<i32>} : memref<1x4x128xf32, #tpu.memory_space<vmem>>, vector<1x4x128xf32>,
    } else {
    }
    return
  }
  func.func @transform_0(%arg0: i32, %arg1: i32, %arg2: i32) -> (i32, i32, i32) {
    %c1_i32 = arith.constant 1 : i32
    %0 = arith.subi %c1_i32, %arg0 : i32
    %1 = arith.muli %arg1, %0 : i32
    %c0_i32 = arith.constant 0 : i32
    %2 = arith.muli %c0_i32, %arg0 : i32
    %3 = arith.addi %1, %2 : i32
    %c1_i32_0 = arith.constant 1 : i32
    %4 = arith.subi %c1_i32_0, %arg0 : i32
    %5 = arith.muli %arg2, %4 : i32
    %c0_i32_1 = arith.constant 0 : i32
    %6 = arith.muli %c0_i32_1, %arg0 : i32
    %7 = arith.addi %5, %6 : i32
    %c0_i32_2 = arith.constant 0 : i32
    %c0_i32_3 = arith.constant 0 : i32
    return %3, %c0_i32_2, %7 : i32, i32, i32
  }
  func.func @transform_1(%arg0: i32, %arg1: i32, %arg2: i32) -> (i32, i32, i32) {
    %c1_i32 = arith.constant 1 : i32
    %0 = arith.subi %c1_i32, %arg0 : i32
    %1 = arith.muli %arg1, %0 : i32
    %c0_i32 = arith.constant 0 : i32
    %2 = arith.muli %c0_i32, %arg0 : i32
    %3 = arith.addi %1, %2 : i32
    %c1_i32_0 = arith.constant 1 : i32
    %4 = arith.subi %c1_i32_0, %arg0 : i32
    %5 = arith.muli %arg2, %4 : i32
    %c0_i32_1 = arith.constant 0 : i32
    %6 = arith.muli %c0_i32_1, %arg0 : i32
    %7 = arith.addi %5, %6 : i32
    %c0_i32_2 = arith.constant 0 : i32
    %c0_i32_3 = arith.constant 0 : i32
    return %3, %c0_i32_2, %7 : i32, i32, i32
  }
  func.func @transform_2(%arg0: i32, %arg1: i32, %arg2: i32) -> (i32, i32) {
    %c0_i32 = arith.constant 0 : i32
    %c0_i32_0 = arith.constant 0 : i32
    %c0_i32_1 = arith.constant 0 : i32
    return %c0_i32, %c0_i32_0 : i32, i32
  }
  func.func @transform_3(%arg0: i32, %arg1: i32, %arg2: i32) -> (i32, i32) {
    %c0_i32 = arith.constant 0 : i32
    %c0_i32_0 = arith.constant 0 : i32
    %c0_i32_1 = arith.constant 0 : i32
    return %c0_i32, %c0_i32_0 : i32, i32
  }
  func.func @transform_4(%arg0: i32, %arg1: i32, %arg2: i32) -> (i32, i32) {
    %c0_i32 = arith.constant 0 : i32
    %c0_i32_0 = arith.constant 0 : i32
    %c0_i32_1 = arith.constant 0 : i32
    return %c0_i32, %c0_i32_0 : i32, i32
  }
  func.func @transform_5(%arg0: i32, %arg1: i32, %arg2: i32) -> (i32, i32) {
    %c0_i32 = arith.constant 0 : i32
    %c0_i32_0 = arith.constant 0 : i32
    %c0_i32_1 = arith.constant 0 : i32
    return %c0_i32, %c0_i32_0 : i32, i32
  }
  func.func @transform_6(%arg0: i32, %arg1: i32, %arg2: i32) -> (i32, i32, i32) {
    %0 = arith.muli %arg1, %arg0 : i32
    %1 = arith.muli %arg2, %arg0 : i32
    %c0_i32 = arith.constant 0 : i32
    %c0_i32_0 = arith.constant 0 : i32
    return %0, %c0_i32, %1 : i32, i32, i32
  }
}

</mosaic_0001>

<llo_original>
// kernel: factorized_reduce.1
$region0: #{factorized_reduce.1}
  #allocation0 [shape = 'u32[]', space=smem, size = 0x4, offset = 0x4, fixed_abs, tag = 'smem constant byte address 0x4 - core index']
  #allocation1 [shape = 'u32[72,128]{1,0:T(1,128)}', space=vmem, size = 0x9000, scoped, tag = 'internal scratch']
  #allocation2 [shape = 'f32[1,4,128]{2,1,0:T(4,128)}', space=vmem, size = 0x800, scoped, tag = 'scratch operand']
  #allocation3 [shape = 'f32[4,1]{1,0:T(4,128)}', space=vmem, size = 0x800, scoped, tag = 'scratch operand']
  #allocation4 [shape = 'f32[4,1]{1,0:T(4,128)}', space=vmem, size = 0x800, scoped, tag = 'scratch operand']
  #allocation5 [shape = 'f32[4,1]{1,0:T(4,128)}', space=vmem, size = 0x800, scoped, tag = 'scratch operand']
  #allocation6 [shape = 'f32[4,1]{1,0:T(4,128)}', space=vmem, size = 0x800, scoped, tag = 'scratch operand']
  %s0 = inlined_call_operand.vmem [shape: f32[1,4,128], index: 0, kind: input, shape index: {}]
  %s1 = inlined_call_operand.vmem [shape: f32[1,4,128], index: 1, kind: input, shape index: {}]
  %s2 = inlined_call_operand.vmem [shape: f32[2,4], index: 2, kind: input, shape index: {}]
  %s3 = inlined_call_operand.vmem [shape: f32[2,4], index: 3, kind: input, shape index: {}]
  %s4 = inlined_call_operand.vmem [shape: f32[4,1], index: 4, kind: input, shape index: {}]
  %s5 = inlined_call_operand.vmem [shape: f32[4,1], index: 5, kind: input, shape index: {}]
  %s6 = inlined_call_operand.vmem [shape: f32[1,4,128], index: 6, kind: output, shape index: {}]
  %s7 = sld [smem:[#allocation0]]
  $region73: #{factorized_reduce.1} parent=0
    _
  %s9 = ssub.s32 1, %s7
  %s10 = scalar_select 0, %s9, %s7
  loop: start=0, step=1, limit=4
  $region2: #{factorized_reduce.1} parent=0 // loop_pre_header
    _
  $region3: #{factorized_reduce.1} parent=0 // loop_header
    %s12 = sphi 0, %s16
    %p13 = scmp.ge.s32.totalorder %s12, 4
    %s19 = sphi 0, %s38
    %s20 = sphi 0, %s34
    %s21 = sphi 0, %s30
    %s22 = sphi 0, %s19
    %s23 = sphi 0, %s20
    %s24 = sphi 0, %s21
    %s25 = sphi 0, %s22
    %s26 = sphi 0, %s23
    %s27 = sphi 0, %s24
    %s49 = sphi 0, %s51
    %s52 = sphi 0, %s49
    %s53 = sphi 0, %s52
    %s69 = sphi 0, %s53
    %s83 = sphi 0, %s85
    %s86 = sphi 0, %s83
    %s87 = sphi 0, %s86
    %s103 = sphi 0, %s87
    %s107 = sphi 0, %s107
    %s109 = sphi 0, %s107
    %s110 = sphi 0, %s109
    %s124 = sphi 0, %s110
    %s128 = sphi 0, %s128
    %s130 = sphi 0, %s128
    %s131 = sphi 0, %s130
    %s145 = sphi 0, %s131
    %s149 = sphi 0, %s149
    %s151 = sphi 0, %s149
    %s152 = sphi 0, %s151
    %s166 = sphi 0, %s152
    %s170 = sphi 0, %s170
    %s172 = sphi 0, %s170
    %s173 = sphi 0, %s172
    %s187 = sphi 0, %s173
    %s199 = sphi 0, %s201
    %s202 = sphi 0, %s199
    %s203 = sphi 0, %s202
    %s219 = sphi 0, %s203
  $region4: #{factorized_reduce.1} parent=0 // loop_header_branch
    %15 = sbr.rel (%p13) target = $region8
  $region5: #{factorized_reduce.1} parent=0 // loop_body
    %s17 = ssub.s32 %s12, 1
    %s18 = ssub.s32 %s12, 2
    %s28 = sadd.s32 1, %s21
    %p29 = scmp.ge.s32.totalorder %s28, 1
    %s30 = scalar_select %p29, 0, %s28
    %s31 = sadd.s32 1, %s20
    %s32 = scalar_select %p29, %s31, %s20
    %p33 = scmp.ge.s32.totalorder %s32, 1
    %s34 = scalar_select %p33, 0, %s32
    %s35 = sadd.s32 1, %s19
    %s36 = scalar_select %p33, %s35, %s19
    %p37 = scmp.ge.s32.totalorder %s36, 2
    %s38 = scalar_select %p37, 0, %s36
    %s39 = ssub.s32 1, %s19
    %s40 = smul.u32 %s20, %s39
    %s41 = smul.u32 %s21, %s39
    %s42 = ssub.s32 1, %s38
    %s43 = smul.u32 %s34, %s42
    %s44 = smul.u32 %s30, %s42
    %s45 = ssub.s32 %s40, %s43
    %s46 = ssub.s32 %s41, %s44
    %s47 = sor.u32 %s45, %s46
    %p48 = scmp.eq.s32.totalorder %s47, 0
    %s50 = sadd.s32 %s49, 1
    %s51 = scalar_select %p48, %s49, %s50
    %p54 = pneg %p48
    %p55 = scmp.eq.s32.totalorder %s12, 1
    %p56 = por %p54, %p55
    %p57 = scmp.ne.s32.totalorder %s49, %s52
    %p58 = scmp.eq.s32.totalorder %s12, 0
    %p59 = por %p57, %p58
    %p60 = scmp.ne.s32.totalorder %s49, %s52
    %p61 = scmp.eq.s32.totalorder %s17, 1
    %p62 = por %p60, %p61
    %p63 = scmp.ne.s32.totalorder %s52, %s53
    %p64 = scmp.eq.s32.totalorder %s17, 0
    %p65 = por %p63, %p64
    %p66 = scmp.ne.s32.totalorder %s52, %s53
    %p67 = scmp.eq.s32.totalorder %s18, 1
    %p68 = por %p66, %p67
    %p70 = scmp.ne.s32.totalorder %s53, %s69
    %p71 = scmp.eq.s32.totalorder %s18, 0
    %p72 = por %p70, %p71
    %s73 = ssub.s32 1, %s19
    %s74 = smul.u32 %s20, %s73
    %s75 = smul.u32 %s21, %s73
    %s76 = ssub.s32 1, %s38
    %s77 = smul.u32 %s34, %s76
    %s78 = smul.u32 %s30, %s76
    %s79 = ssub.s32 %s74, %s77
    %s80 = ssub.s32 %s75, %s78
    %s81 = sor.u32 %s79, %s80
    %p82 = scmp.eq.s32.totalorder %s81, 0
    %s84 = sadd.s32 %s83, 1
    %s85 = scalar_select %p82, %s83, %s84
    %p88 = pneg %p82
    %p89 = scmp.eq.s32.totalorder %s12, 1
    %p90 = por %p88, %p89
    %p91 = scmp.ne.s32.totalorder %s83, %s86
    %p92 = scmp.eq.s32.totalorder %s12, 0
    %p93 = por %p91, %p92
    %p94 = scmp.ne.s32.totalorder %s83, %s86
    %p95 = scmp.eq.s32.totalorder %s17, 1
    %p96 = por %p94, %p95
    %p97 = scmp.ne.s32.totalorder %s86, %s87
    %p98 = scmp.eq.s32.totalorder %s17, 0
    %p99 = por %p97, %p98
    %p100 = scmp.ne.s32.totalorder %s86, %s87
    %p101 = scmp.eq.s32.totalorder %s18, 1
    %p102 = por %p100, %p101
    %p104 = scmp.ne.s32.totalorder %s87, %s103
    %p105 = scmp.eq.s32.totalorder %s18, 0
    %p106 = por %p104, %p105
    %s108 = sadd.s32 %s107, 1
    %p111 = scmp.eq.s32.totalorder %s12, 1
    %p112 = scmp.ne.s32.totalorder %s107, %s109
    %p113 = scmp.eq.s32.totalorder %s12, 0
    %p114 = por %p112, %p113
    %p115 = scmp.ne.s32.totalorder %s107, %s109
    %p116 = scmp.eq.s32.totalorder %s17, 1
    %p117 = por %p115, %p116
    %p118 = scmp.ne.s32.totalorder %s109, %s110
    %p119 = scmp.eq.s32.totalorder %s17, 0
    %p120 = por %p118, %p119
    %p121 = scmp.ne.s32.totalorder %s109, %s110
    %p122 = scmp.eq.s32.totalorder %s18, 1
    %p123 = por %p121, %p122
    %p125 = scmp.ne.s32.totalorder %s110, %s124
    %p126 = scmp.eq.s32.totalorder %s18, 0
    %p127 = por %p125, %p126
    %s129 = sadd.s32 %s128, 1
    %p132 = scmp.eq.s32.totalorder %s12, 1
    %p133 = scmp.ne.s32.totalorder %s128, %s130
    %p134 = scmp.eq.s32.totalorder %s12, 0
    %p135 = por %p133, %p134
    %p136 = scmp.ne.s32.totalorder %s128, %s130
    %p137 = scmp.eq.s32.totalorder %s17, 1
    %p138 = por %p136, %p137
    %p139 = scmp.ne.s32.totalorder %s130, %s131
    %p140 = scmp.eq.s32.totalorder %s17, 0
    %p141 = por %p139, %p140
    %p142 = scmp.ne.s32.totalorder %s130, %s131
    %p143 = scmp.eq.s32.totalorder %s18, 1
    %p144 = por %p142, %p143
    %p146 = scmp.ne.s32.totalorder %s131, %s145
    %p147 = scmp.eq.s32.totalorder %s18, 0
    %p148 = por %p146, %p147
    %s150 = sadd.s32 %s149, 1
    %p153 = scmp.eq.s32.totalorder %s12, 1
    %p154 = scmp.ne.s32.totalorder %s149, %s151
    %p155 = scmp.eq.s32.totalorder %s12, 0
    %p156 = por %p154, %p155
    %p157 = scmp.ne.s32.totalorder %s149, %s151
    %p158 = scmp.eq.s32.totalorder %s17, 1
    %p159 = por %p157, %p158
    %p160 = scmp.ne.s32.totalorder %s151, %s152
    %p161 = scmp.eq.s32.totalorder %s17, 0
    %p162 = por %p160, %p161
    %p163 = scmp.ne.s32.totalorder %s151, %s152
    %p164 = scmp.eq.s32.totalorder %s18, 1
    %p165 = por %p163, %p164
    %p167 = scmp.ne.s32.totalorder %s152, %s166
    %p168 = scmp.eq.s32.totalorder %s18, 0
    %p169 = por %p167, %p168
    %s171 = sadd.s32 %s170, 1
    %p174 = scmp.eq.s32.totalorder %s12, 1
    %p175 = scmp.ne.s32.totalorder %s170, %s172
    %p176 = scmp.eq.s32.totalorder %s12, 0
    %p177 = por %p175, %p176
    %p178 = scmp.ne.s32.totalorder %s170, %s172
    %p179 = scmp.eq.s32.totalorder %s17, 1
    %p180 = por %p178, %p179
    %p181 = scmp.ne.s32.totalorder %s172, %s173
    %p182 = scmp.eq.s32.totalorder %s17, 0
    %p183 = por %p181, %p182
    %p184 = scmp.ne.s32.totalorder %s172, %s173
    %p185 = scmp.eq.s32.totalorder %s18, 1
    %p186 = por %p184, %p185
    %p188 = scmp.ne.s32.totalorder %s173, %s187
    %p189 = scmp.eq.s32.totalorder %s18, 0
    %p190 = por %p188, %p189
    %s191 = smul.u32 %s20, %s19
    %s192 = smul.u32 %s21, %s19
    %s193 = smul.u32 %s34, %s38
    %s194 = smul.u32 %s30, %s38
    %s195 = ssub.s32 %s191, %s193
    %s196 = ssub.s32 %s192, %s194
    %s197 = sor.u32 %s195, %s196
    %p198 = scmp.eq.s32.totalorder %s197, 0
    %s200 = sadd.s32 %s199, 1
    %s201 = scalar_select %p198, %s199, %s200
    %p204 = pneg %p198
    %p205 = scmp.eq.s32.totalorder %s12, 1
    %p206 = por %p204, %p205
    %p207 = scmp.ne.s32.totalorder %s199, %s202
    %p208 = scmp.eq.s32.totalorder %s12, 0
    %p209 = por %p207, %p208
    %p210 = scmp.ne.s32.totalorder %s199, %s202
    %p211 = scmp.eq.s32.totalorder %s17, 1
    %p212 = por %p210, %p211
    %p213 = scmp.ne.s32.totalorder %s202, %s203
    %p214 = scmp.eq.s32.totalorder %s17, 0
    %p215 = por %p213, %p214
    %p216 = scmp.ne.s32.totalorder %s202, %s203
    %p217 = scmp.eq.s32.totalorder %s18, 1
    %p218 = por %p216, %p217
    %p220 = scmp.ne.s32.totalorder %s203, %s219
    %p221 = scmp.eq.s32.totalorder %s18, 0
    %p222 = por %p220, %p221
    %p223 = scmp.le.s32.totalorder 1, %s12
    %p224 = scmp.lt.s32.totalorder %s12, 3
    %p225 = pnand %p223, %p224
    %p226 = pneg %p225
    // Predicated region
    $region9: #{factorized_reduce.1} parent=5 // pred_check
      _
    $region10: #{factorized_reduce.1} parent=5 // pred_check_branch
      %228 = sbr.rel (%p225) target = $region12
    $region11: #{factorized_reduce.1} parent=5 // pred_region
      %s229 = ssub.s32 %s12, 1
      // Predicated region
      $region13: #{factorized_reduce.1} parent=11 // pred_check
        %p230 = pneg %p120
      $region14: #{factorized_reduce.1} parent=11 // pred_check_branch
        %232 = sbr.rel (%p230) target = $region16
      $region15: #{factorized_reduce.1} parent=11 // pred_region
        _
      $region16: #{factorized_reduce.1} parent=11 // pred_fallthru
        _
      // Predicated region
      $region17: #{factorized_reduce.1} parent=11 // pred_check
        %p233 = pneg %p141
      $region18: #{factorized_reduce.1} parent=11 // pred_check_branch
        %235 = sbr.rel (%p233) target = $region20
      $region19: #{factorized_reduce.1} parent=11 // pred_region
        _
      $region20: #{factorized_reduce.1} parent=11 // pred_fallthru
        _
      // Predicated region
      $region21: #{factorized_reduce.1} parent=11 // pred_check
        %p236 = pneg %p162
      $region22: #{factorized_reduce.1} parent=11 // pred_check_branch
        %238 = sbr.rel (%p236) target = $region24
      $region23: #{factorized_reduce.1} parent=11 // pred_region
        _
      $region24: #{factorized_reduce.1} parent=11 // pred_fallthru
        _
      // Predicated region
      $region25: #{factorized_reduce.1} parent=11 // pred_check
        %p239 = pneg %p183
      $region26: #{factorized_reduce.1} parent=11 // pred_check_branch
        %241 = sbr.rel (%p239) target = $region28
      $region27: #{factorized_reduce.1} parent=11 // pred_region
        _
      $region28: #{factorized_reduce.1} parent=11 // pred_fallthru
        _
    $region12: #{factorized_reduce.1} parent=5 // pred_fallthru
      _
    %p242 = scmp.lt.s32.totalorder %s12, 2
    // Predicated region
    $region29: #{factorized_reduce.1} parent=5 // pred_check
      %p243 = pneg %p242
    $region30: #{factorized_reduce.1} parent=5 // pred_check_branch
      %245 = sbr.rel (%p243) target = $region32
    $region31: #{factorized_reduce.1} parent=5 // pred_region
      // Predicated region
      $region33: #{factorized_reduce.1} parent=31 // pred_check
        %p246 = pneg %p59
      $region34: #{factorized_reduce.1} parent=31 // pred_check_branch
        %248 = sbr.rel (%p246) target = $region36
      $region35: #{factorized_reduce.1} parent=31 // pred_region
        %s249 = ssub.s32 1, %s19
        %s250 = smul.u32 %s20, %s249
        %s251 = smul.u32 %s21, %s249
        %p252 = scmp.lt.s32.totalorder %s250, 0
        %s253 = scalar_select %p252, %s250, 0
        %p254 = scmp.lt.s32.totalorder %s251, 0
        %s255 = scalar_select %p254, %s251, 0
        %s256 = sadd.s32 %s255, %s253
        %s257 = smul.addr %s256, 4
        %s258 = scalar_lea.vmem %s0, %s257
        %s259 = ssub.s32 1, %s19
        %s260 = smul.u32 %s20, %s259
        %s261 = smul.u32 %s21, %s259
      $region36: #{factorized_reduce.1} parent=31 // pred_fallthru
        _
      // Predicated region
      $region37: #{factorized_reduce.1} parent=31 // pred_check
        %p262 = pneg %p93
      $region38: #{factorized_reduce.1} parent=31 // pred_check_branch
        %264 = sbr.rel (%p262) target = $region40
      $region39: #{factorized_reduce.1} parent=31 // pred_region
        %s265 = ssub.s32 1, %s19
        %s266 = smul.u32 %s20, %s265
        %s267 = smul.u32 %s21, %s265
        %p268 = scmp.lt.s32.totalorder %s266, 0
        %s269 = scalar_select %p268, %s266, 0
        %p270 = scmp.lt.s32.totalorder %s267, 0
        %s271 = scalar_select %p270, %s267, 0
        %s272 = sadd.s32 %s271, %s269
        %s273 = smul.addr %s272, 4
        %s274 = scalar_lea.vmem %s1, %s273
        %s275 = ssub.s32 1, %s19
        %s276 = smul.u32 %s20, %s275
        %s277 = smul.u32 %s21, %s275
      $region40: #{factorized_reduce.1} parent=31 // pred_fallthru
        _
    $region32: #{factorized_reduce.1} parent=5 // pred_fallthru
      _
    %p278 = scmp.le.s32.totalorder 1, %s12
    %p279 = scmp.lt.s32.totalorder %s12, 3
    %p280 = pnand %p278, %p279
    %p281 = pneg %p280
    // Predicated region
    $region41: #{factorized_reduce.1} parent=5 // pred_check
      _
    $region42: #{factorized_reduce.1} parent=5 // pred_check_branch
      %283 = sbr.rel (%p280) target = $region44
    $region43: #{factorized_reduce.1} parent=5 // pred_region
      %s284 = ssub.s32 %s12, 1
      %s285 = ssub.s32 1, %s22
      %s286 = smul.u32 %s23, %s285
      %s287 = smul.u32 %s24, %s285
      %p288 = scmp.lt.s32.totalorder %s286, 0
      %s289 = scalar_select %p288, %s286, 0
      %p290 = scmp.lt.s32.totalorder %s287, 0
      %s291 = scalar_select %p290, %s287, 0
      %s292 = sadd.s32 %s291, %s289
      %s293 = smul.addr %s292, 4
      %s294 = scalar_lea.vmem %s0, %s293
      %p295 = pneg %p65
      %p296 = pneg %p62
      %s297 = ssub.s32 1, %s22
      %s298 = smul.u32 %s23, %s297
      %s299 = smul.u32 %s24, %s297
      %p300 = scmp.lt.s32.totalorder %s298, 0
      %s301 = scalar_select %p300, %s298, 0
      %p302 = scmp.lt.s32.totalorder %s299, 0
      %s303 = scalar_select %p302, %s299, 0
      %s304 = sadd.s32 %s303, %s301
      %s305 = smul.addr %s304, 4
      %s306 = scalar_lea.vmem %s1, %s305
      %p307 = pneg %p99
      %p308 = pneg %p96
      %p309 = pneg %p120
      %p310 = pneg %p117
      %p311 = pneg %p141
      %p312 = pneg %p138
      %p313 = pneg %p162
      %p314 = pneg %p159
      %p315 = pneg %p183
      %p316 = pneg %p180
      %p317 = pneg %p215
      %p318 = pneg %p212
      %s319 = smul.u32 %s23, %s22
      %s320 = smul.u32 %s24, %s22
      %p321 = scmp.lt.s32.totalorder %s319, 0
      %s322 = scalar_select %p321, %s319, 0
      %p323 = scmp.lt.s32.totalorder %s320, 0
      %s324 = scalar_select %p323, %s320, 0
      %s325 = sadd.s32 %s324, %s322
      %s326 = smul.addr %s325, 4
      %s327 = scalar_lea.vmem %s6, %s326
      %s328 = ssub.s32 1, %s22
      %s329 = smul.u32 %s23, %s328
      %s330 = smul.u32 %s24, %s328
      %p331 = scmp.lt.s32.totalorder %s329, 0
      %s332 = scalar_select %p331, %s329, 0
      %p333 = scmp.lt.s32.totalorder %s330, 0
      %s334 = scalar_select %p333, %s330, 0
      %s335 = sadd.s32 %s334, %s332
      %s336 = smul.addr %s335, 4
      %s337 = scalar_lea.vmem %s0, %s336
      %s338 = ssub.s32 1, %s22
      %s339 = smul.u32 %s23, %s338
      %s340 = smul.u32 %s24, %s338
      %s341 = ssub.s32 1, %s22
      %s342 = smul.u32 %s23, %s341
      %s343 = smul.u32 %s24, %s341
      %p344 = scmp.lt.s32.totalorder %s342, 0
      %s345 = scalar_select %p344, %s342, 0
      %p346 = scmp.lt.s32.totalorder %s343, 0
      %s347 = scalar_select %p346, %s343, 0
      %s348 = sadd.s32 %s347, %s345
      %s349 = smul.addr %s348, 4
      %s350 = scalar_lea.vmem %s1, %s349
      %s351 = ssub.s32 1, %s22
      %s352 = smul.u32 %s23, %s351
      %s353 = smul.u32 %s24, %s351
      %s354 = smul.u32 %s23, %s22
      %s355 = smul.u32 %s24, %s22
      %p356 = scmp.lt.s32.totalorder %s354, 0
      %s357 = scalar_select %p356, %s354, 0
      %p358 = scmp.lt.s32.totalorder %s355, 0
      %s359 = scalar_select %p358, %s355, 0
      %s360 = sadd.s32 %s359, %s357
      %s361 = smul.addr %s360, 4
      %s362 = scalar_lea.vmem %s6, %s361
      %s363 = smul.u32 %s23, %s22
      %s364 = smul.u32 %s24, %s22
      %s365 = sadd.s32 %s23, %s24
      %p366 = scmp.eq.s32.totalorder %s22, 0
      // Predicated region
      $region45: #{factorized_reduce.1} parent=43 // pred_check
        %p367 = pneg %p366
      $region46: #{factorized_reduce.1} parent=43 // pred_check_branch
        %369 = sbr.rel (%p367) target = $region48
      $region47: #{factorized_reduce.1} parent=43 // pred_region
        %p370 = scmp.eq.s32.totalorder %s23, 0
        %p371 = scmp.eq.s32.totalorder %s24, 0
        %p372 = pnand %p370, %p371
        %p373 = pneg %p372
        // Predicated region
        $region49: #{factorized_reduce.1} parent=47 // pred_check
          _
        $region50: #{factorized_reduce.1} parent=47 // pred_check_branch
          %375 = sbr.rel (%p372) target = $region52
        $region51: #{factorized_reduce.1} parent=47 // pred_region
          %vm376 = vcmask 3072
          %377 = vst.msk [vmem:[#allocation3] sm:$0xf] %vm376, 0.0
          %378 = vst.msk [vmem:[#allocation4] sm:$0xf] %vm376, 0.0
        $region52: #{factorized_reduce.1} parent=47 // pred_fallthru
          _
        %v379 = vld [vmem:[%s337] sm:$0xf]
        %v380 = vmax.f32 %v379, 0.0
        %v381 = vld [vmem:[%s350] sm:$0xf]
        %v382 = vmax.f32 %v381, 0.0
        %v383 = vld [vmem:[%s2] sm:$0x3]
        %vm384 = vcmask 31744
        %v386 = vsel %vm384, %v383, 0
        %vm388 = vcmask 1043456
        %v390 = vsel %vm388, %v380, 0
        %392 = vmatpush.msra.mxu0 0.0
        %393 = vmatpush.msra.mxu0 0.0
        %394 = vmatpush.msra.mxu0 0.0
        %395 = vmatpush.msra.mxu0 0.0
        %396 = vmatpush.msra.mxu0 0.0
        %397 = vmatpush.msra.mxu0 0.0
        %398 = vmatpush.msra.mxu0 0.0
        %399 = vmatpush.msra.mxu0 0.0
        %400 = vmatpush.msra.mxu0 0.0
        %401 = vmatpush.msra.mxu0 0.0
        %402 = vmatpush.msra.mxu0 0.0
        %403 = vmatpush.msra.mxu0 0.0
        %404 = vmatpush.msra.mxu0 0.0
        %405 = vmatpush.msra.mxu0 0.0
        %406 = vmatpush.msra.mxu0 0.0
        %407 = vmatpush.msra.mxu0 %v390
        %408 = vmatmul.f32.gmra.mxu0 %v386
        %v409 = vpop.f32.mrf.mxu0
        %v410 = vadd.f32 0.0, %v409
        %411 = vdwg.mxu0
        %v412 = vld [vmem:[%s3] sm:$0x3]
        %v414 = vsel %vm384, %v412, 0
        %v417 = vsel %vm388, %v382, 0
        %419 = vmatpush.msra.mxu0 0.0
        %420 = vmatpush.msra.mxu0 0.0
        %421 = vmatpush.msra.mxu0 0.0
        %422 = vmatpush.msra.mxu0 0.0
        %423 = vmatpush.msra.mxu0 0.0
        %424 = vmatpush.msra.mxu0 0.0
        %425 = vmatpush.msra.mxu0 0.0
        %426 = vmatpush.msra.mxu0 0.0
        %427 = vmatpush.msra.mxu0 0.0
        %428 = vmatpush.msra.mxu0 0.0
        %429 = vmatpush.msra.mxu0 0.0
        %430 = vmatpush.msra.mxu0 0.0
        %431 = vmatpush.msra.mxu0 0.0
        %432 = vmatpush.msra.mxu0 0.0
        %433 = vmatpush.msra.mxu0 0.0
        %434 = vmatpush.msra.mxu0 %v417
        %435 = vmatmul.f32.gmra.mxu0 %v414
        %v436 = vpop.f32.mrf.mxu0
        %v437 = vadd.f32 0.0, %v436
        %438 = vdwg.mxu0
        %v440 = vrot.slane %v437, 6
        %vm442 = vcmask 1041408
        %v443 = vsel %vm442, %v410, %v440
        %s444 = smul.u32 %s365, 4
        %s445 = scalar_lea.vmem [#allocation2], %s444
        %446 = vst [vmem:[%s445] sm:$0xf] %v443
        %v447 = vld [vmem:[#allocation3] sm:$0xf]
        %v448 = vsel %vm388, %v443, 0.0
        %449 = vadd.xlane.f32.xlu0 %v448
        %v450 = vpop.xlane.xlu0 %449
        %v451 = vadd.f32 %v447, %v450
        %vm452 = vcmask 3072
        %453 = vst.msk [vmem:[#allocation3] sm:$0xf] %vm452, %v451
        %v454 = vld [vmem:[#allocation4] sm:$0xf]
        %v455 = vmul.f32 %v443, %v443
        %v456 = vsel %vm388, %v455, 0.0
        %457 = vadd.xlane.f32.xlu0 %v456
        %v458 = vpop.xlane.xlu0 %457
        %v459 = vadd.f32 %v454, %v458
        %460 = vst.msk [vmem:[#allocation4] sm:$0xf] %vm452, %v459
      $region48: #{factorized_reduce.1} parent=43 // pred_fallthru
        _
      %p461 = scmp.eq.s32.totalorder %s22, 1
      // Predicated region
      $region53: #{factorized_reduce.1} parent=43 // pred_check
        %p462 = pneg %p461
      $region54: #{factorized_reduce.1} parent=43 // pred_check_branch
        %464 = sbr.rel (%p462) target = $region56
      $region55: #{factorized_reduce.1} parent=43 // pred_region
        %p465 = scmp.eq.s32.totalorder %s23, 0
        %p466 = scmp.eq.s32.totalorder %s24, 0
        %p467 = pnand %p465, %p466
        %p468 = pneg %p467
        // Predicated region
        $region57: #{factorized_reduce.1} parent=55 // pred_check
          _
        $region58: #{factorized_reduce.1} parent=55 // pred_check_branch
          %470 = sbr.rel (%p467) target = $region60
        $region59: #{factorized_reduce.1} parent=55 // pred_region
          %v471 = vld [vmem:[#allocation3] sm:$0xf]
          %v472 = vmul.f32 %v471, 0.0078125
          %v473 = vld [vmem:[#allocation4] sm:$0xf]
          %v474 = vmul.f32 %v473, 0.0078125
          %v475 = vmul.f32 %v472, %v472
          %v476 = vsub.f32 %v474, %v475
          %v477 = vadd.f32 %v476, 1e-05
          %v478 = vrsqrt.pop %v477
          %v479 = vmul.f32 %v478, %v477
          %v480 = vmul.f32 %v479, %v478
          %v481 = vmul.f32 0.5, %v480
          %v482 = vsub.f32 1.5, %v481
          %v483 = vmul.f32 %v478, %v482
          %vm484 = vweird.f32 %v477
          %vm485 = vweird.f32 %v478
          %vm486 = vmor %vm484, %vm485
          %v487 = vsel %vm486, %v478, %v483
          %v488 = vld [vmem:[%s4] sm:$0xf]
          %v489 = vmul.f32 %v488, %v487
          %vm490 = vcmask 3072
          %491 = vst.msk [vmem:[#allocation5] sm:$0xf] %vm490, %v489
          %v492 = vld [vmem:[%s5] sm:$0xf]
          %v493 = vld [vmem:[%s4] sm:$0xf]
          %v494 = vmul.f32 %v472, %v493
          %v495 = vmul.f32 %v494, %v487
          %v496 = vsub.f32 %v492, %v495
          %497 = vst.msk [vmem:[#allocation6] sm:$0xf] %vm490, %v496
        $region60: #{factorized_reduce.1} parent=55 // pred_fallthru
          _
        %s498 = smul.u32 %s365, 4
        %s499 = scalar_lea.vmem [#allocation2], %s498
        %v500 = vld [vmem:[%s499] sm:$0xf]
        %v501 = vld [vmem:[#allocation5] sm:$0xf]
        %503 = vset.pattern.permute.xlu0 0
        %504 = vperm.xlu0 %503, %v501
        %v505 = vpop.permute.xlu0 %504
        %v507 = vmul.f32 %v500, %v505
        %v508 = vld [vmem:[#allocation6] sm:$0xf]
        %510 = vset.pattern.permute.xlu0 0
        %511 = vperm.xlu0 %510, %v508
        %v512 = vpop.permute.xlu0 %511
        %v514 = vadd.f32 %v507, %v512
        %515 = vst [vmem:[%s362] sm:$0xf] %v514
      $region56: #{factorized_reduce.1} parent=43 // pred_fallthru
        _
      %s516 = smul.u32 %s23, %s22
      %s517 = smul.u32 %s24, %s22
      %p518 = scmp.lt.s32.totalorder %s516, 0
      %s519 = scalar_select %p518, %s516, 0
      %p520 = scmp.lt.s32.totalorder %s517, 0
      %s521 = scalar_select %p520, %s517, 0
      %s522 = sadd.s32 %s521, %s519
      %s523 = smul.addr %s522, 4
      %s524 = scalar_lea.vmem %s6, %s523
      // Predicated region
      $region61: #{factorized_reduce.1} parent=43 // pred_check
        %p525 = pneg %p212
      $region62: #{factorized_reduce.1} parent=43 // pred_check_branch
        %527 = sbr.rel (%p525) target = $region64
      $region63: #{factorized_reduce.1} parent=43 // pred_region
        %s528 = smul.u32 %s23, %s22
        %s529 = smul.u32 %s24, %s22
      $region64: #{factorized_reduce.1} parent=43 // pred_fallthru
        _
    $region44: #{factorized_reduce.1} parent=5 // pred_fallthru
      _
    %p530 = scmp.le.s32.totalorder 2, %s12
    // Predicated region
    $region65: #{factorized_reduce.1} parent=5 // pred_check
      %p531 = pneg %p530
    $region66: #{factorized_reduce.1} parent=5 // pred_check_branch
      %533 = sbr.rel (%p531) target = $region68
    $region67: #{factorized_reduce.1} parent=5 // pred_region
      %s534 = ssub.s32 %s12, 2
      // Predicated region
      $region69: #{factorized_reduce.1} parent=67 // pred_check
        %p535 = pneg %p218
      $region70: #{factorized_reduce.1} parent=67 // pred_check_branch
        %537 = sbr.rel (%p535) target = $region72
      $region71: #{factorized_reduce.1} parent=67 // pred_region
        %s538 = smul.u32 %s26, %s25
        %s539 = smul.u32 %s27, %s25
        %p540 = scmp.lt.s32.totalorder %s538, 0
        %s541 = scalar_select %p540, %s538, 0
        %p542 = scmp.lt.s32.totalorder %s539, 0
        %s543 = scalar_select %p542, %s539, 0
        %s544 = sadd.s32 %s543, %s541
        %s545 = smul.addr %s544, 4
        %s546 = scalar_lea.vmem %s6, %s545
      $region72: #{factorized_reduce.1} parent=67 // pred_fallthru
        _
    $region68: #{factorized_reduce.1} parent=5 // pred_fallthru
      _
  $region6: #{factorized_reduce.1} parent=0 // loop_footer
    %s16 = sadd.s32 1, %s12
  $region7: #{factorized_reduce.1} parent=0 // loop_footer_branch
    %11 = sbr.rel target = $region3
  $region8: #{factorized_reduce.1} parent=0 // loop_exit
    _

</llo_original>
